<compile_context>
chip_gen: v6e
topology: v6e:2x2x1
jax: 0.10.0
libtpu: 0.0.40
codegen_flags: <defaults>
</compile_context>

<pallas_src>
import functools
import math

import jax
import jax.numpy as jnp
from jax.experimental import pallas as pl
from jax.experimental.pallas import tpu as pltpu


_LANE_WIDTH = 1024      # lane-dense last dim (multiple of 128)
_MAX_BLOCK_ROWS = 512   # 512 * 1024 * 4B = 2 MiB per f32 tile


def _round_up(x: int, m: int) -> int:
    return (x + m - 1) // m * m


def _dropout_kernel(x_ref, bits_ref, o_ref, *, threshold: int, scale: float):
    # Keep with probability (1 - p): drop iff (low 23 random bits) < threshold.
    r = (bits_ref[...] & jnp.uint32(0x7FFFFF)).astype(jnp.int32)
    keep = r >= jnp.int32(threshold)
    x = x_ref[...]
    y = jnp.where(keep, x * jnp.asarray(scale, dtype=x.dtype), jnp.zeros_like(x))
    o_ref[...] = y.astype(o_ref.dtype)


@functools.partial(jax.jit, static_argnames=("p", "training"))
def spatial_dropout1d(x, key, *, p: float, training: bool = True):
    """Equivalent of spatialDropout1D(p).forward(x) for x of shape (B, C, L)."""
    if (not training) or p <= 0.0:
        return x
    if p >= 1.0:
        return jnp.zeros_like(x)

    orig_shape = x.shape
    n = math.prod(orig_shape)

    # Lane-dense slab: (rows_pad, 1024) with rows_pad an exact multiple of the
    # row block so every grid step sees a full (8,128)-aligned tile.
    w = _LANE_WIDTH
    rows = pl.cdiv(n, w)
    block_rows = _MAX_BLOCK_ROWS if rows >= _MAX_BLOCK_ROWS else _round_up(rows, 8)
    rows_pad = _round_up(rows, block_rows)
    n_pad = rows_pad * w

    x_flat = x.reshape(-1)
    if n_pad != n:
        x_flat = jnp.pad(x_flat, (0, n_pad - n))
    x2 = x_flat.reshape(rows_pad, w)

    # Uniform random bits for the Bernoulli mask (kernel uses the low 23 bits).
    bits = jax.random.bits(key, (rows_pad, w), dtype=jnp.uint32)

    threshold = min(int(round(p * (1 << 23))), (1 << 23) - 1)
    scale = 1.0 / (1.0 - p)
    kernel = functools.partial(_dropout_kernel, threshold=threshold, scale=scale)

    itemsize = x.dtype.itemsize
    out2 = pl.pallas_call(
        kernel,
        out_shape=jax.ShapeDtypeStruct((rows_pad, w), x.dtype),
        grid=(rows_pad // block_rows,),
        in_specs=[
            pl.BlockSpec((block_rows, w), lambda i: (i, 0)),   # x tile
            pl.BlockSpec((block_rows, w), lambda i: (i, 0)),   # random bits tile
        ],
        out_specs=pl.BlockSpec((block_rows, w), lambda i: (i, 0)),
        compiler_params=pltpu.CompilerParams(
            dimension_semantics=("parallel",),
        ),
        cost_estimate=pl.CostEstimate(
            flops=2 * n_pad,
            transcendentals=0,
            bytes_accessed=n_pad * (2 * itemsize + 4),
        ),
    )(x2, bits)

    return out2.reshape(-1)[:n].reshape(orig_shape)


if __name__ == "__main__":
    B, C, L = 2, 8, 128          # (batch, channels, sequence length)
    p = 0.3

    root = jax.random.PRNGKey(0)
    x_key, drop_key = jax.random.split(root)
    x = jax.random.normal(x_key, (B, C, L), dtype=jnp.float32)

    y = spatial_dropout1d(x, drop_key, p=p, training=True)
    y = jax.block_until_ready(y)
    assert y.shape == x.shape and y.dtype == x.dtype

    # Dropout semantics: kept entries equal x / (1 - p), dropped entries are 0.
    kept = y != 0.0
    scaled_ok = jnp.allclose(
        jnp.where(kept, y, 0.0),
        jnp.where(kept, x / (1.0 - p), 0.0),
        rtol=1e-5,
        atol=1e-6,
    )
    frac_kept = float(jnp.mean(kept.astype(jnp.float32)))
    assert bool(scaled_ok), "kept elements must equal x / (1 - p)"
    assert 0.55 < frac_kept < 0.85, f"keep fraction {frac_kept} far from {1 - p}"

    # Eval mode is identity (nn.Dropout in eval()).
    y_eval = spatial_dropout1d(x, drop_key, p=p, training=False)
    assert jnp.array_equal(jax.block_until_ready(y_eval), x)

    print("KERNEL_OK")
</pallas_src>

<mosaic_0001>
module attributes {stable_mosaic.version = 11 : i64} {
  func.func @_dropout_kernel(%arg0: i32, %arg1: memref<8x1024xf32, #tpu.memory_space<vmem>>, %arg2: memref<8x1024xi32, #tpu.memory_space<vmem>>, %arg3: memref<8x1024xf32, #tpu.memory_space<vmem>>) attributes {dimension_semantics = [#tpu.dimension_semantics<parallel>], iteration_bounds = array<i64: 1>, scalar_prefetch = 0 : i64, scratch_operands = 0 : i64, tpu.core_type = #tpu.core_type<tc>, window_params = [{transform_indices = @transform_0, window_bounds = array<i64: 8, 1024>}, {transform_indices = @transform_1, window_bounds = array<i64: 8, 1024>}, {transform_indices = @transform_2, window_bounds = array<i64: 8, 1024>}]} {
    %c0 = arith.constant 0 : index
    %c0_0 = arith.constant 0 : index
    %0 = vector.load %arg2[%c0, %c0_0] : memref<8x1024xi32, #tpu.memory_space<vmem>>, vector<8x1024xi32>
    %c8388607_i32 = arith.constant 8388607 : i32
    %1 = vector.broadcast %c8388607_i32 : i32 to vector<8x1024xi32>
    %2 = arith.andi %0, %1 : vector<8x1024xi32>
    %c2516582_i32 = arith.constant 2516582 : i32
    %3 = vector.broadcast %c2516582_i32 : i32 to vector<8x1024xi32>
    %4 = arith.cmpi sge, %2, %3 : vector<8x1024xi32>
    %c0_1 = arith.constant 0 : index
    %c0_2 = arith.constant 0 : index
    %5 = vector.load %arg1[%c0_1, %c0_2] : memref<8x1024xf32, #tpu.memory_space<vmem>>, vector<8x1024xf32>
    %cst = arith.constant 1.42857146 : f32
    %6 = vector.broadcast %cst : f32 to vector<8x1024xf32>
    %7 = arith.mulf %5, %6 : vector<8x1024xf32>
    %cst_3 = arith.constant 0.000000e+00 : f32
    %8 = vector.broadcast %cst_3 : f32 to vector<8x1024xf32>
    %9 = arith.select %4, %7, %8 : vector<8x1024xi1>, vector<8x1024xf32>
    %c0_4 = arith.constant 0 : index
    %c0_5 = arith.constant 0 : index
    %10 = vector.load %arg3[%c0_4, %c0_5] : memref<8x1024xf32, #tpu.memory_space<vmem>>, vector<8x1024xf32>
    tpu.vector_store %arg3[%c0_4, %c0_5], %9 {strides = array<i32>} : memref<8x1024xf32, #tpu.memory_space<vmem>>, vector<8x1024xf32>,
    return
  }
  func.func @transform_0(%arg0: i32) -> (i32, i32) {
    %c0_i32 = arith.constant 0 : i32
    %c0_i32_0 = arith.constant 0 : i32
    return %arg0, %c0_i32 : i32, i32
  }
  func.func @transform_1(%arg0: i32) -> (i32, i32) {
    %c0_i32 = arith.constant 0 : i32
    %c0_i32_0 = arith.constant 0 : i32
    return %arg0, %c0_i32 : i32, i32
  }
  func.func @transform_2(%arg0: i32) -> (i32, i32) {
    %c0_i32 = arith.constant 0 : i32
    %c0_i32_0 = arith.constant 0 : i32
    return %arg0, %c0_i32 : i32, i32
  }
}

</mosaic_0001>

<llo_original>
// kernel: spatial_dropout1d.1
$region0: #{spatial_dropout1d.1}
  #allocation0 [shape = 'u32[]', space=smem, size = 0x4, offset = 0x4, fixed_abs, tag = 'smem constant byte address 0x4 - core index']
  #allocation1 [shape = 'u32[144,128]{1,0:T(1,128)}', space=vmem, size = 0x12000, scoped, tag = 'internal scratch']
  %s0 = inlined_call_operand.vmem [shape: f32[8,1024], index: 0, kind: input, shape index: {}]
  %s1 = inlined_call_operand.vmem [shape: u32[8,1024], index: 1, kind: input, shape index: {}]
  %s2 = inlined_call_operand.vmem [shape: f32[8,1024], index: 2, kind: output, shape index: {}]
  %s3 = sld [smem:[#allocation0]]
  $region18: #{spatial_dropout1d.1} parent=0
    _
  %s5 = ssub.s32 1, %s3
  %s6 = scalar_select 0, %s5, %s3
  // Predicated region
  $region2: #{spatial_dropout1d.1} parent=0 // pred_check
    _
  $region3: #{spatial_dropout1d.1} parent=0 // pred_check_branch
    %8 = sbr.rel (0) target = $region5
  $region4: #{spatial_dropout1d.1} parent=0 // pred_region
    _
  $region5: #{spatial_dropout1d.1} parent=0 // pred_fallthru
    _
  // Predicated region
  $region6: #{spatial_dropout1d.1} parent=0 // pred_check
    _
  $region7: #{spatial_dropout1d.1} parent=0 // pred_check_branch
    %10 = sbr.rel (0) target = $region9
  $region8: #{spatial_dropout1d.1} parent=0 // pred_region
    _
  $region9: #{spatial_dropout1d.1} parent=0 // pred_fallthru
    _
  %v11 = vld [vmem:[%s1] sm:$0xff]
  %v12 = vld [vmem:[%s1 + $0x8] sm:$0xff]
  %v13 = vld [vmem:[%s1 + $0x10] sm:$0xff]
  %v14 = vld [vmem:[%s1 + $0x18] sm:$0xff]
  %v15 = vld [vmem:[%s1 + $0x20] sm:$0xff]
  %v16 = vld [vmem:[%s1 + $0x28] sm:$0xff]
  %v17 = vld [vmem:[%s1 + $0x30] sm:$0xff]
  %v18 = vld [vmem:[%s1 + $0x38] sm:$0xff]
  %v19 = vand.u32 %v11, 8388607
  %v20 = vand.u32 %v12, 8388607
  %v21 = vand.u32 %v13, 8388607
  %v22 = vand.u32 %v14, 8388607
  %v23 = vand.u32 %v15, 8388607
  %v24 = vand.u32 %v16, 8388607
  %v25 = vand.u32 %v17, 8388607
  %v26 = vand.u32 %v18, 8388607
  %vm27 = vcmp.ge.s32.totalorder %v19, 2516582
  %vm28 = vcmp.ge.s32.totalorder %v20, 2516582
  %vm29 = vcmp.ge.s32.totalorder %v21, 2516582
  %vm30 = vcmp.ge.s32.totalorder %v22, 2516582
  %vm31 = vcmp.ge.s32.totalorder %v23, 2516582
  %vm32 = vcmp.ge.s32.totalorder %v24, 2516582
  %vm33 = vcmp.ge.s32.totalorder %v25, 2516582
  %vm34 = vcmp.ge.s32.totalorder %v26, 2516582
  %v35 = vld [vmem:[%s0] sm:$0xff]
  %v36 = vld [vmem:[%s0 + $0x8] sm:$0xff]
  %v37 = vld [vmem:[%s0 + $0x10] sm:$0xff]
  %v38 = vld [vmem:[%s0 + $0x18] sm:$0xff]
  %v39 = vld [vmem:[%s0 + $0x20] sm:$0xff]
  %v40 = vld [vmem:[%s0 + $0x28] sm:$0xff]
  %v41 = vld [vmem:[%s0 + $0x30] sm:$0xff]
  %v42 = vld [vmem:[%s0 + $0x38] sm:$0xff]
  %v43 = vmul.f32 %v35, 1.4285715
  %v44 = vmul.f32 %v36, 1.4285715
  %v45 = vmul.f32 %v37, 1.4285715
  %v46 = vmul.f32 %v38, 1.4285715
  %v47 = vmul.f32 %v39, 1.4285715
  %v48 = vmul.f32 %v40, 1.4285715
  %v49 = vmul.f32 %v41, 1.4285715
  %v50 = vmul.f32 %v42, 1.4285715
  %v51 = vsel %vm27, %v43, 0.0
  %v52 = vsel %vm28, %v44, 0.0
  %v53 = vsel %vm29, %v45, 0.0
  %v54 = vsel %vm30, %v46, 0.0
  %v55 = vsel %vm31, %v47, 0.0
  %v56 = vsel %vm32, %v48, 0.0
  %v57 = vsel %vm33, %v49, 0.0
  %v58 = vsel %vm34, %v50, 0.0
  %59 = vst [vmem:[%s2] sm:$0xff] %v51
  %60 = vst [vmem:[%s2 + $0x8] sm:$0xff] %v52
  %61 = vst [vmem:[%s2 + $0x10] sm:$0xff] %v53
  %62 = vst [vmem:[%s2 + $0x18] sm:$0xff] %v54
  %63 = vst [vmem:[%s2 + $0x20] sm:$0xff] %v55
  %64 = vst [vmem:[%s2 + $0x28] sm:$0xff] %v56
  %65 = vst [vmem:[%s2 + $0x30] sm:$0xff] %v57
  %66 = vst [vmem:[%s2 + $0x38] sm:$0xff] %v58
  // Predicated region
  $region10: #{spatial_dropout1d.1} parent=0 // pred_check
    _
  $region11: #{spatial_dropout1d.1} parent=0 // pred_check_branch
    %68 = sbr.rel (0) target = $region13
  $region12: #{spatial_dropout1d.1} parent=0 // pred_region
    _
  $region13: #{spatial_dropout1d.1} parent=0 // pred_fallthru
    _
  // Predicated region
  $region14: #{spatial_dropout1d.1} parent=0 // pred_check
    _
  $region15: #{spatial_dropout1d.1} parent=0 // pred_check_branch
    %70 = sbr.rel (0) target = $region17
  $region16: #{spatial_dropout1d.1} parent=0 // pred_region
    _
  $region17: #{spatial_dropout1d.1} parent=0 // pred_fallthru
    _

</llo_original>
